<compile_context>
chip_gen: v5e
topology: v5e:2x2
jax: 0.10.0
libtpu: 0.0.40
codegen_flags: <defaults>
</compile_context>

<pallas_src>
import jax
import jax.numpy as jnp
from jax.experimental import pallas as pl
from jax.experimental.pallas import tpu as pltpu


def _mlp_kernel(x_ref, w1_ref, b1_ref, w2_ref, b2_ref, w3_ref, b3_ref, o_ref):
    """Fused 3-layer MLP forward for one batch tile: (matmul+bias+ReLU) x2, matmul+bias."""
    x = x_ref[...]

    h1 = jnp.dot(x, w1_ref[...], preferred_element_type=jnp.float32) + b1_ref[...]
    h1 = jnp.maximum(h1, 0.0)

    h2 = jnp.dot(h1, w2_ref[...], preferred_element_type=jnp.float32) + b2_ref[...]
    h2 = jnp.maximum(h2, 0.0)

    out = jnp.dot(h2, w3_ref[...], preferred_element_type=jnp.float32) + b3_ref[...]
    o_ref[...] = out.astype(o_ref.dtype)


def _round_up(n, m):
    return ((n + m - 1) // m) * m


def regression_model_forward(x, params, tile_b=4096):
    """x: (B, input_size) f32. params: dict of w1,b1,w2,b2,w3,b3. Returns (B, 1) f32."""
    w1, b1 = params["w1"], params["b1"]
    w2, b2 = params["w2"], params["b2"]
    w3, b3 = params["w3"], params["b3"]

    B, F = x.shape

    # Tile must be a multiple of 8 (f32 sublane constraint); don't over-tile small batches.
    tile_b = max(8, min(int(tile_b), _round_up(B, 8)))
    tile_b = _round_up(tile_b, 8)

    b_pad = _round_up(B, tile_b)
    if b_pad != B:
        x = jnp.pad(x, ((0, b_pad - B), (0, 0)))
    num_tiles = b_pad // tile_b

    # Weights/biases: full block, constant index map -> resident in VMEM across steps.
    def resident(a):
        return pl.BlockSpec(a.shape, lambda i: (0, 0))

    n_w_elems = (F * 12 + 12) + (12 * 24 + 24) + (24 * 1 + 1)
    flops = 2 * b_pad * (F * 12 + 12 * 24 + 24 * 1) + b_pad * (12 + 12 + 24 + 24 + 1)
    bytes_accessed = b_pad * (F + 1) * 4 + n_w_elems * 4

    out = pl.pallas_call(
        _mlp_kernel,
        out_shape=jax.ShapeDtypeStruct((b_pad, 1), jnp.float32),
        grid_spec=pltpu.PrefetchScalarGridSpec(
            num_scalar_prefetch=0,
            grid=(num_tiles,),
            in_specs=[
                pl.BlockSpec((tile_b, F), lambda i: (i, 0)),
                resident(w1), resident(b1),
                resident(w2), resident(b2),
                resident(w3), resident(b3),
            ],
            out_specs=pl.BlockSpec((tile_b, 1), lambda i: (i, 0)),
        ),
        compiler_params=pltpu.CompilerParams(
            dimension_semantics=("parallel",),
        ),
        cost_estimate=pl.CostEstimate(
            flops=flops, transcendentals=0, bytes_accessed=bytes_accessed),
    )(x, w1, b1, w2, b2, w3, b3)

    if b_pad != B:
        out = out[:B]
    return out


def init_params(input_size, key):
    """Deterministic init mimicking PyTorch nn.Linear default (uniform +/- 1/sqrt(fan_in))."""
    dims = [(input_size, 12), (12, 24), (24, 1)]
    params = {}
    for i, (fan_in, fan_out) in enumerate(dims, start=1):
        key, kw, kb = jax.random.split(key, 3)
        bound = 1.0 / jnp.sqrt(jnp.float32(fan_in))
        params[f"w{i}"] = jax.random.uniform(
            kw, (fan_in, fan_out), jnp.float32, minval=-bound, maxval=bound)
        params[f"b{i}"] = jax.random.uniform(
            kb, (1, fan_out), jnp.float32, minval=-bound, maxval=bound)
    return params


if __name__ == "__main__":
    key = jax.random.PRNGKey(0)
    k_x, k_p = jax.random.split(key)

    batch = 300        # not a multiple of the tile -> exercises padding + multi-tile grid
    input_size = 16
    tile_b = 128       # small tile for the demo; default 4096 for production batches

    x = jax.random.normal(k_x, (batch, input_size), jnp.float32)
    params = init_params(input_size, k_p)

    y = regression_model_forward(x, params, tile_b=tile_b)
    y = jax.block_until_ready(y)

    # Pure-JAX reference check of the same math.
    h1 = jnp.maximum(x @ params["w1"] + params["b1"], 0.0)
    h2 = jnp.maximum(h1 @ params["w2"] + params["b2"], 0.0)
    y_ref = h2 @ params["w3"] + params["b3"]

    assert y.shape == (batch, 1)
    assert jnp.allclose(y, y_ref, atol=1e-5, rtol=1e-5), float(jnp.max(jnp.abs(y - y_ref)))

    print("KERNEL_OK")
</pallas_src>

<mosaic_0001>
module attributes {stable_mosaic.version = 11 : i64} {
  func.func @_mlp_kernel(%arg0: i32, %arg1: memref<128x16xf32, #tpu.memory_space<vmem>>, %arg2: memref<16x12xf32, #tpu.memory_space<vmem>>, %arg3: memref<1x12xf32, #tpu.memory_space<vmem>>, %arg4: memref<12x24xf32, #tpu.memory_space<vmem>>, %arg5: memref<1x24xf32, #tpu.memory_space<vmem>>, %arg6: memref<24x1xf32, #tpu.memory_space<vmem>>, %arg7: memref<1x1xf32, #tpu.memory_space<vmem>>, %arg8: memref<128x1xf32, #tpu.memory_space<vmem>>) attributes {dimension_semantics = [#tpu.dimension_semantics<parallel>], iteration_bounds = array<i64: 3>, scalar_prefetch = 0 : i64, scratch_operands = 0 : i64, tpu.core_type = #tpu.core_type<tc>, window_params = [{transform_indices = @transform_0, window_bounds = array<i64: 128, 16>}, {pipeline_mode = #tpu.pipeline_mode<synchronous>, transform_indices = @transform_1, window_bounds = array<i64: 16, 12>}, {pipeline_mode = #tpu.pipeline_mode<synchronous>, transform_indices = @transform_2, window_bounds = array<i64: 1, 12>}, {pipeline_mode = #tpu.pipeline_mode<synchronous>, transform_indices = @transform_3, window_bounds = array<i64: 12, 24>}, {pipeline_mode = #tpu.pipeline_mode<synchronous>, transform_indices = @transform_4, window_bounds = array<i64: 1, 24>}, {pipeline_mode = #tpu.pipeline_mode<synchronous>, transform_indices = @transform_5, window_bounds = array<i64: 24, 1>}, {pipeline_mode = #tpu.pipeline_mode<synchronous>, transform_indices = @transform_6, window_bounds = array<i64: 1, 1>}, {transform_indices = @transform_7, window_bounds = array<i64: 128, 1>}]} {
    %c0 = arith.constant 0 : index
    %c0_0 = arith.constant 0 : index
    %0 = vector.load %arg1[%c0, %c0_0] : memref<128x16xf32, #tpu.memory_space<vmem>>, vector<128x16xf32>
    %c0_1 = arith.constant 0 : index
    %c0_2 = arith.constant 0 : index
    %1 = vector.load %arg2[%c0_1, %c0_2] : memref<16x12xf32, #tpu.memory_space<vmem>>, vector<16x12xf32>
    %cst = arith.constant dense<0.000000e+00> : vector<128x12xf32>
    %2 = tpu.matmul %0, %1, %cst {dimension_numbers = #tpu.dot_dimension_numbers<[1], [0], [0], [1], [0, 0, 1, 1], [], []>} : vector<128x16xf32>, vector<16x12xf32>, vector<128x12xf32> -> vector<128x12xf32>
    %c0_3 = arith.constant 0 : index
    %c0_4 = arith.constant 0 : index
    %3 = vector.load %arg3[%c0_3, %c0_4] : memref<1x12xf32, #tpu.memory_space<vmem>>, vector<1x12xf32>
    %4 = vector.broadcast %3 : vector<1x12xf32> to vector<128x12xf32>
    %5 = arith.addf %2, %4 : vector<128x12xf32>
    %cst_5 = arith.constant 0.000000e+00 : f32
    %6 = vector.broadcast %cst_5 : f32 to vector<128x12xf32>
    %7 = arith.maximumf %5, %6 : vector<128x12xf32>
    %c0_6 = arith.constant 0 : index
    %c0_7 = arith.constant 0 : index
    %8 = vector.load %arg4[%c0_6, %c0_7] : memref<12x24xf32, #tpu.memory_space<vmem>>, vector<12x24xf32>
    %cst_8 = arith.constant dense<0.000000e+00> : vector<128x24xf32>
    %9 = tpu.matmul %7, %8, %cst_8 {dimension_numbers = #tpu.dot_dimension_numbers<[1], [0], [0], [1], [0, 0, 1, 1], [], []>} : vector<128x12xf32>, vector<12x24xf32>, vector<128x24xf32> -> vector<128x24xf32>
    %c0_9 = arith.constant 0 : index
    %c0_10 = arith.constant 0 : index
    %10 = vector.load %arg5[%c0_9, %c0_10] : memref<1x24xf32, #tpu.memory_space<vmem>>, vector<1x24xf32>
    %11 = vector.broadcast %10 : vector<1x24xf32> to vector<128x24xf32>
    %12 = arith.addf %9, %11 : vector<128x24xf32>
    %cst_11 = arith.constant 0.000000e+00 : f32
    %13 = vector.broadcast %cst_11 : f32 to vector<128x24xf32>
    %14 = arith.maximumf %12, %13 : vector<128x24xf32>
    %c0_12 = arith.constant 0 : index
    %c0_13 = arith.constant 0 : index
    %15 = vector.load %arg6[%c0_12, %c0_13] : memref<24x1xf32, #tpu.memory_space<vmem>>, vector<24x1xf32>
    %cst_14 = arith.constant dense<0.000000e+00> : vector<128x1xf32>
    %16 = tpu.matmul %14, %15, %cst_14 {dimension_numbers = #tpu.dot_dimension_numbers<[1], [0], [0], [1], [0, 0, 1, 1], [], []>} : vector<128x24xf32>, vector<24x1xf32>, vector<128x1xf32> -> vector<128x1xf32>
    %c0_15 = arith.constant 0 : index
    %c0_16 = arith.constant 0 : index
    %17 = vector.load %arg7[%c0_15, %c0_16] : memref<1x1xf32, #tpu.memory_space<vmem>>, vector<1x1xf32>
    %18 = vector.broadcast %17 : vector<1x1xf32> to vector<128x1xf32>
    %19 = arith.addf %16, %18 : vector<128x1xf32>
    %c0_17 = arith.constant 0 : index
    %c0_18 = arith.constant 0 : index
    %20 = vector.load %arg8[%c0_17, %c0_18] : memref<128x1xf32, #tpu.memory_space<vmem>>, vector<128x1xf32>
    tpu.vector_store %arg8[%c0_17, %c0_18], %19 {strides = array<i32>} : memref<128x1xf32, #tpu.memory_space<vmem>>, vector<128x1xf32>,
    return
  }
  func.func @transform_0(%arg0: i32) -> (i32, i32) {
    %c0_i32 = arith.constant 0 : i32
    %c0_i32_0 = arith.constant 0 : i32
    return %arg0, %c0_i32 : i32, i32
  }
  func.func @transform_1(%arg0: i32) -> (i32, i32) {
    %c0_i32 = arith.constant 0 : i32
    %c0_i32_0 = arith.constant 0 : i32
    %c0_i32_1 = arith.constant 0 : i32
    return %c0_i32, %c0_i32_0 : i32, i32
  }
  func.func @transform_2(%arg0: i32) -> (i32, i32) {
    %c0_i32 = arith.constant 0 : i32
    %c0_i32_0 = arith.constant 0 : i32
    %c0_i32_1 = arith.constant 0 : i32
    return %c0_i32, %c0_i32_0 : i32, i32
  }
  func.func @transform_3(%arg0: i32) -> (i32, i32) {
    %c0_i32 = arith.constant 0 : i32
    %c0_i32_0 = arith.constant 0 : i32
    %c0_i32_1 = arith.constant 0 : i32
    return %c0_i32, %c0_i32_0 : i32, i32
  }
  func.func @transform_4(%arg0: i32) -> (i32, i32) {
    %c0_i32 = arith.constant 0 : i32
    %c0_i32_0 = arith.constant 0 : i32
    %c0_i32_1 = arith.constant 0 : i32
    return %c0_i32, %c0_i32_0 : i32, i32
  }
  func.func @transform_5(%arg0: i32) -> (i32, i32) {
    %c0_i32 = arith.constant 0 : i32
    %c0_i32_0 = arith.constant 0 : i32
    %c0_i32_1 = arith.constant 0 : i32
    return %c0_i32, %c0_i32_0 : i32, i32
  }
  func.func @transform_6(%arg0: i32) -> (i32, i32) {
    %c0_i32 = arith.constant 0 : i32
    %c0_i32_0 = arith.constant 0 : i32
    %c0_i32_1 = arith.constant 0 : i32
    return %c0_i32, %c0_i32_0 : i32, i32
  }
  func.func @transform_7(%arg0: i32) -> (i32, i32) {
    %c0_i32 = arith.constant 0 : i32
    %c0_i32_0 = arith.constant 0 : i32
    return %arg0, %c0_i32 : i32, i32
  }
}

</mosaic_0001>

<llo_original>
// kernel: tpu_custom_call.1
$region0: #{tpu_custom_call.1}
  #allocation0 [shape = 'u32[]', space=smem, size = 0x4, offset = 0x4, fixed_abs, tag = 'smem constant byte address 0x4 - core index']
  #allocation1 [shape = 'u32[72,128]{1,0:T(1,128)}', space=vmem, size = 0x9000, scoped, tag = 'internal scratch']
  #allocation2 [shape = 'f32[1,1]{1,0:T(1,128)S(1)}', space=vmem, size = 0x200, scoped, tag = 'scoped memory for tpu_custom_call.1']
  %s0 = inlined_call_operand.vmem [shape: f32[384,16], index: 0, kind: input, shape index: {}]
  %s1 = inlined_call_operand.vmem [shape: f32[16,12], index: 1, kind: input, shape index: {}]
  %s2 = inlined_call_operand.vmem [shape: f32[1,12], index: 2, kind: input, shape index: {}]
  %s3 = inlined_call_operand.vmem [shape: f32[12,24], index: 3, kind: input, shape index: {}]
  %s4 = inlined_call_operand.vmem [shape: f32[1,24], index: 4, kind: input, shape index: {}]
  %s5 = inlined_call_operand.vmem [shape: f32[24,1], index: 5, kind: input, shape index: {}]
  %s6 = inlined_call_operand.<no memory space> [shape: f32[1,1], index: 6, kind: input, shape index: {}]
  %s7 = inlined_call_operand.vmem [shape: f32[384,1], index: 7, kind: output, shape index: {}]
  %s8 = sld [smem:[#allocation0]]
  $region61: #{tpu_custom_call.1} parent=0
    _
  %s10 = ssub.s32 1, %s8
  %s11 = scalar_select 0, %s10, %s8
  %v12 = vstv %s6
  %13 = vst [vmem:[#allocation2] sm:$0x1] %v12
  loop: start=0, step=1, limit=5
  $region2: #{tpu_custom_call.1} parent=0 // loop_pre_header
    _
  $region3: #{tpu_custom_call.1} parent=0 // loop_header
    %s15 = sphi 0, %s19
    %p16 = scmp.ge.s32.totalorder %s15, 5
    %s25 = sphi 0, %s27
    %s28 = sphi 0, %s25
    %s29 = sphi 0, %s28
    %s45 = sphi 0, %s29
    %s49 = sphi 0, %s49
    %s51 = sphi 0, %s49
    %s52 = sphi 0, %s51
    %s66 = sphi 0, %s52
    %s70 = sphi 0, %s70
    %s72 = sphi 0, %s70
    %s73 = sphi 0, %s72
    %s87 = sphi 0, %s73
    %s91 = sphi 0, %s91
    %s93 = sphi 0, %s91
    %s94 = sphi 0, %s93
    %s108 = sphi 0, %s94
    %s112 = sphi 0, %s112
    %s114 = sphi 0, %s112
    %s115 = sphi 0, %s114
    %s129 = sphi 0, %s115
    %s133 = sphi 0, %s133
    %s135 = sphi 0, %s133
    %s136 = sphi 0, %s135
    %s150 = sphi 0, %s136
    %s154 = sphi 0, %s154
    %s156 = sphi 0, %s154
    %s157 = sphi 0, %s156
    %s171 = sphi 0, %s157
    %s177 = sphi 0, %s179
    %s180 = sphi 0, %s177
    %s181 = sphi 0, %s180
    %s197 = sphi 0, %s181
  $region4: #{tpu_custom_call.1} parent=0 // loop_header_branch
    %18 = sbr.rel (%p16) target = $region8
  $region5: #{tpu_custom_call.1} parent=0 // loop_body
    %s20 = ssub.s32 %s15, 1
    %s21 = ssub.s32 %s15, 2
    %s22 = sadd.s32 %s15, 1
    %s23 = ssub.s32 %s15, %s22
    %p24 = scmp.eq.s32.totalorder %s23, 0
    %s26 = sadd.s32 %s25, 1
    %s27 = scalar_select %p24, %s25, %s26
    %p30 = pneg %p24
    %p31 = scmp.eq.s32.totalorder %s15, 2
    %p32 = por %p30, %p31
    %p33 = scmp.ne.s32.totalorder %s25, %s28
    %p34 = scmp.eq.s32.totalorder %s15, 0
    %p35 = por %p33, %p34
    %p36 = scmp.ne.s32.totalorder %s25, %s28
    %p37 = scmp.eq.s32.totalorder %s20, 2
    %p38 = por %p36, %p37
    %p39 = scmp.ne.s32.totalorder %s28, %s29
    %p40 = scmp.eq.s32.totalorder %s20, 0
    %p41 = por %p39, %p40
    %p42 = scmp.ne.s32.totalorder %s28, %s29
    %p43 = scmp.eq.s32.totalorder %s21, 2
    %p44 = por %p42, %p43
    %p46 = scmp.ne.s32.totalorder %s29, %s45
    %p47 = scmp.eq.s32.totalorder %s21, 0
    %p48 = por %p46, %p47
    %s50 = sadd.s32 %s49, 1
    %p53 = scmp.eq.s32.totalorder %s15, 2
    %p54 = scmp.ne.s32.totalorder %s49, %s51
    %p55 = scmp.eq.s32.totalorder %s15, 0
    %p56 = por %p54, %p55
    %p57 = scmp.ne.s32.totalorder %s49, %s51
    %p58 = scmp.eq.s32.totalorder %s20, 2
    %p59 = por %p57, %p58
    %p60 = scmp.ne.s32.totalorder %s51, %s52
    %p61 = scmp.eq.s32.totalorder %s20, 0
    %p62 = por %p60, %p61
    %p63 = scmp.ne.s32.totalorder %s51, %s52
    %p64 = scmp.eq.s32.totalorder %s21, 2
    %p65 = por %p63, %p64
    %p67 = scmp.ne.s32.totalorder %s52, %s66
    %p68 = scmp.eq.s32.totalorder %s21, 0
    %p69 = por %p67, %p68
    %s71 = sadd.s32 %s70, 1
    %p74 = scmp.eq.s32.totalorder %s15, 2
    %p75 = scmp.ne.s32.totalorder %s70, %s72
    %p76 = scmp.eq.s32.totalorder %s15, 0
    %p77 = por %p75, %p76
    %p78 = scmp.ne.s32.totalorder %s70, %s72
    %p79 = scmp.eq.s32.totalorder %s20, 2
    %p80 = por %p78, %p79
    %p81 = scmp.ne.s32.totalorder %s72, %s73
    %p82 = scmp.eq.s32.totalorder %s20, 0
    %p83 = por %p81, %p82
    %p84 = scmp.ne.s32.totalorder %s72, %s73
    %p85 = scmp.eq.s32.totalorder %s21, 2
    %p86 = por %p84, %p85
    %p88 = scmp.ne.s32.totalorder %s73, %s87
    %p89 = scmp.eq.s32.totalorder %s21, 0
    %p90 = por %p88, %p89
    %s92 = sadd.s32 %s91, 1
    %p95 = scmp.eq.s32.totalorder %s15, 2
    %p96 = scmp.ne.s32.totalorder %s91, %s93
    %p97 = scmp.eq.s32.totalorder %s15, 0
    %p98 = por %p96, %p97
    %p99 = scmp.ne.s32.totalorder %s91, %s93
    %p100 = scmp.eq.s32.totalorder %s20, 2
    %p101 = por %p99, %p100
    %p102 = scmp.ne.s32.totalorder %s93, %s94
    %p103 = scmp.eq.s32.totalorder %s20, 0
    %p104 = por %p102, %p103
    %p105 = scmp.ne.s32.totalorder %s93, %s94
    %p106 = scmp.eq.s32.totalorder %s21, 2
    %p107 = por %p105, %p106
    %p109 = scmp.ne.s32.totalorder %s94, %s108
    %p110 = scmp.eq.s32.totalorder %s21, 0
    %p111 = por %p109, %p110
    %s113 = sadd.s32 %s112, 1
    %p116 = scmp.eq.s32.totalorder %s15, 2
    %p117 = scmp.ne.s32.totalorder %s112, %s114
    %p118 = scmp.eq.s32.totalorder %s15, 0
    %p119 = por %p117, %p118
    %p120 = scmp.ne.s32.totalorder %s112, %s114
    %p121 = scmp.eq.s32.totalorder %s20, 2
    %p122 = por %p120, %p121
    %p123 = scmp.ne.s32.totalorder %s114, %s115
    %p124 = scmp.eq.s32.totalorder %s20, 0
    %p125 = por %p123, %p124
    %p126 = scmp.ne.s32.totalorder %s114, %s115
    %p127 = scmp.eq.s32.totalorder %s21, 2
    %p128 = por %p126, %p127
    %p130 = scmp.ne.s32.totalorder %s115, %s129
    %p131 = scmp.eq.s32.totalorder %s21, 0
    %p132 = por %p130, %p131
    %s134 = sadd.s32 %s133, 1
    %p137 = scmp.eq.s32.totalorder %s15, 2
    %p138 = scmp.ne.s32.totalorder %s133, %s135
    %p139 = scmp.eq.s32.totalorder %s15, 0
    %p140 = por %p138, %p139
    %p141 = scmp.ne.s32.totalorder %s133, %s135
    %p142 = scmp.eq.s32.totalorder %s20, 2
    %p143 = por %p141, %p142
    %p144 = scmp.ne.s32.totalorder %s135, %s136
    %p145 = scmp.eq.s32.totalorder %s20, 0
    %p146 = por %p144, %p145
    %p147 = scmp.ne.s32.totalorder %s135, %s136
    %p148 = scmp.eq.s32.totalorder %s21, 2
    %p149 = por %p147, %p148
    %p151 = scmp.ne.s32.totalorder %s136, %s150
    %p152 = scmp.eq.s32.totalorder %s21, 0
    %p153 = por %p151, %p152
    %s155 = sadd.s32 %s154, 1
    %p158 = scmp.eq.s32.totalorder %s15, 2
    %p159 = scmp.ne.s32.totalorder %s154, %s156
    %p160 = scmp.eq.s32.totalorder %s15, 0
    %p161 = por %p159, %p160
    %p162 = scmp.ne.s32.totalorder %s154, %s156
    %p163 = scmp.eq.s32.totalorder %s20, 2
    %p164 = por %p162, %p163
    %p165 = scmp.ne.s32.totalorder %s156, %s157
    %p166 = scmp.eq.s32.totalorder %s20, 0
    %p167 = por %p165, %p166
    %p168 = scmp.ne.s32.totalorder %s156, %s157
    %p169 = scmp.eq.s32.totalorder %s21, 2
    %p170 = por %p168, %p169
    %p172 = scmp.ne.s32.totalorder %s157, %s171
    %p173 = scmp.eq.s32.totalorder %s21, 0
    %p174 = por %p172, %p173
    %s175 = ssub.s32 %s15, %s22
    %p176 = scmp.eq.s32.totalorder %s175, 0
    %s178 = sadd.s32 %s177, 1
    %s179 = scalar_select %p176, %s177, %s178
    %p182 = pneg %p176
    %p183 = scmp.eq.s32.totalorder %s15, 2
    %p184 = por %p182, %p183
    %p185 = scmp.ne.s32.totalorder %s177, %s180
    %p186 = scmp.eq.s32.totalorder %s15, 0
    %p187 = por %p185, %p186
    %p188 = scmp.ne.s32.totalorder %s177, %s180
    %p189 = scmp.eq.s32.totalorder %s20, 2
    %p190 = por %p188, %p189
    %p191 = scmp.ne.s32.totalorder %s180, %s181
    %p192 = scmp.eq.s32.totalorder %s20, 0
    %p193 = por %p191, %p192
    %p194 = scmp.ne.s32.totalorder %s180, %s181
    %p195 = scmp.eq.s32.totalorder %s21, 2
    %p196 = por %p194, %p195
    %p198 = scmp.ne.s32.totalorder %s181, %s197
    %p199 = scmp.eq.s32.totalorder %s21, 0
    %p200 = por %p198, %p199
    %p201 = scmp.le.s32.totalorder 1, %s15
    %p202 = scmp.lt.s32.totalorder %s15, 4
    %p203 = pnand %p201, %p202
    %p204 = pneg %p203
    // Predicated region
    $region9: #{tpu_custom_call.1} parent=5 // pred_check
      _
    $region10: #{tpu_custom_call.1} parent=5 // pred_check_branch
      %206 = sbr.rel (%p203) target = $region12
    $region11: #{tpu_custom_call.1} parent=5 // pred_region
      %s207 = ssub.s32 %s15, 1
      // Predicated region
      $region13: #{tpu_custom_call.1} parent=11 // pred_check
        %p208 = pneg %p62
      $region14: #{tpu_custom_call.1} parent=11 // pred_check_branch
        %210 = sbr.rel (%p208) target = $region16
      $region15: #{tpu_custom_call.1} parent=11 // pred_region
        _
      $region16: #{tpu_custom_call.1} parent=11 // pred_fallthru
        _
      // Predicated region
      $region17: #{tpu_custom_call.1} parent=11 // pred_check
        %p211 = pneg %p83
      $region18: #{tpu_custom_call.1} parent=11 // pred_check_branch
        %213 = sbr.rel (%p211) target = $region20
      $region19: #{tpu_custom_call.1} parent=11 // pred_region
        _
      $region20: #{tpu_custom_call.1} parent=11 // pred_fallthru
        _
      // Predicated region
      $region21: #{tpu_custom_call.1} parent=11 // pred_check
        %p214 = pneg %p104
      $region22: #{tpu_custom_call.1} parent=11 // pred_check_branch
        %216 = sbr.rel (%p214) target = $region24
      $region23: #{tpu_custom_call.1} parent=11 // pred_region
        _
      $region24: #{tpu_custom_call.1} parent=11 // pred_fallthru
        _
      // Predicated region
      $region25: #{tpu_custom_call.1} parent=11 // pred_check
        %p217 = pneg %p125
      $region26: #{tpu_custom_call.1} parent=11 // pred_check_branch
        %219 = sbr.rel (%p217) target = $region28
      $region27: #{tpu_custom_call.1} parent=11 // pred_region
        _
      $region28: #{tpu_custom_call.1} parent=11 // pred_fallthru
        _
      // Predicated region
      $region29: #{tpu_custom_call.1} parent=11 // pred_check
        %p220 = pneg %p146
      $region30: #{tpu_custom_call.1} parent=11 // pred_check_branch
        %222 = sbr.rel (%p220) target = $region32
      $region31: #{tpu_custom_call.1} parent=11 // pred_region
        _
      $region32: #{tpu_custom_call.1} parent=11 // pred_fallthru
        _
      // Predicated region
      $region33: #{tpu_custom_call.1} parent=11 // pred_check
        %p223 = pneg %p167
      $region34: #{tpu_custom_call.1} parent=11 // pred_check_branch
        %225 = sbr.rel (%p223) target = $region36
      $region35: #{tpu_custom_call.1} parent=11 // pred_region
        _
      $region36: #{tpu_custom_call.1} parent=11 // pred_fallthru
        _
    $region12: #{tpu_custom_call.1} parent=5 // pred_fallthru
      _
    %p226 = scmp.lt.s32.totalorder %s15, 3
    // Predicated region
    $region37: #{tpu_custom_call.1} parent=5 // pred_check
      %p227 = pneg %p226
    $region38: #{tpu_custom_call.1} parent=5 // pred_check_branch
      %229 = sbr.rel (%p227) target = $region40
    $region39: #{tpu_custom_call.1} parent=5 // pred_region
      // Predicated region
      $region41: #{tpu_custom_call.1} parent=39 // pred_check
        %p230 = pneg %p35
      $region42: #{tpu_custom_call.1} parent=39 // pred_check_branch
        %232 = sbr.rel (%p230) target = $region44
      $region43: #{tpu_custom_call.1} parent=39 // pred_region
        %s233 = smul.u32 16, %s15
        %p234 = scmp.lt.s32.totalorder %s233, 47
        %s235 = scalar_select %p234, %s233, 47
        %s236 = smul.addr %s235, 8
        %s237 = scalar_lea.vmem %s0, %s236
        %s238 = smul.u32 16, %s15
      $region44: #{tpu_custom_call.1} parent=39 // pred_fallthru
        _
    $region40: #{tpu_custom_call.1} parent=5 // pred_fallthru
      _
    %p239 = scmp.le.s32.totalorder 1, %s15
    %p240 = scmp.lt.s32.totalorder %s15, 4
    %p241 = pnand %p239, %p240
    %p242 = pneg %p241
    // Predicated region
    $region45: #{tpu_custom_call.1} parent=5 // pred_check
      _
    $region46: #{tpu_custom_call.1} parent=5 // pred_check_branch
      %244 = sbr.rel (%p241) target = $region48
    $region47: #{tpu_custom_call.1} parent=5 // pred_region
      %s245 = ssub.s32 %s15, 1
      %s246 = smul.u32 16, %s20
      %p247 = scmp.lt.s32.totalorder %s246, 47
      %s248 = scalar_select %p247, %s246, 47
      %s249 = smul.addr %s248, 8
      %s250 = scalar_lea.vmem %s0, %s249
      %p251 = pneg %p41
      %p252 = pneg %p38
      %p253 = pneg %p62
      %p254 = pneg %p59
      %p255 = pneg %p83
      %p256 = pneg %p80
      %p257 = pneg %p104
      %p258 = pneg %p101
      %p259 = pneg %p125
      %p260 = pneg %p122
      %p261 = pneg %p146
      %p262 = pneg %p143
      %p263 = pneg %p167
      %p264 = pneg %p164
      %p265 = pneg %p193
      %p266 = pneg %p190
      %s267 = smul.u32 16, %s20
      %p268 = scmp.lt.s32.totalorder %s267, 47
      %s269 = scalar_select %p268, %s267, 47
      %s270 = smul.addr %s269, 8
      %s271 = scalar_lea.vmem %s7, %s270
      %s272 = smul.u32 16, %s20
      %p273 = scmp.lt.s32.totalorder %s272, 47
      %s274 = scalar_select %p273, %s272, 47
      %s275 = smul.addr %s274, 8
      %s276 = scalar_lea.vmem %s0, %s275
      %s277 = smul.u32 16, %s20
      %s278 = smul.u32 16, %s20
      %p279 = scmp.lt.s32.totalorder %s278, 47
      %s280 = scalar_select %p279, %s278, 47
      %s281 = smul.addr %s280, 8
      %s282 = scalar_lea.vmem %s7, %s281
      %s283 = smul.u32 16, %s20
      %v284 = vld [vmem:[%s276] sm:$0xff]
      %v285 = vld [vmem:[%s276 + $0x8] sm:$0xff]
      %v286 = vld [vmem:[%s276 + $0x10] sm:$0xff]
      %v287 = vld [vmem:[%s276 + $0x18] sm:$0xff]
      %v288 = vld [vmem:[%s276 + $0x20] sm:$0xff]
      %v289 = vld [vmem:[%s276 + $0x28] sm:$0xff]
      %v290 = vld [vmem:[%s276 + $0x30] sm:$0xff]
      %v291 = vld [vmem:[%s276 + $0x38] sm:$0xff]
      %v292 = vld [vmem:[%s276 + $0x40] sm:$0xff]
      %v293 = vld [vmem:[%s276 + $0x48] sm:$0xff]
      %v294 = vld [vmem:[%s276 + $0x50] sm:$0xff]
      %v295 = vld [vmem:[%s276 + $0x58] sm:$0xff]
      %v296 = vld [vmem:[%s276 + $0x60] sm:$0xff]
      %v297 = vld [vmem:[%s276 + $0x68] sm:$0xff]
      %v298 = vld [vmem:[%s276 + $0x70] sm:$0xff]
      %v299 = vld [vmem:[%s276 + $0x78] sm:$0xff]
      %v300 = vld [vmem:[%s1] sm:$0xff]
      %v301 = vld [vmem:[%s1 + $0x8] sm:$0xff]
      %v302 = vld [vmem:[%s2] sm:$0x1]
      %v304 = vperm.slane %v302, 0
      %vm306 = vcmask 130048
      %v308 = vsel %vm306, %v284, 0
      %v311 = vsel %vm306, %v285, 0
      %v314 = vsel %vm306, %v286, 0
      %v317 = vsel %vm306, %v287, 0
      %v320 = vsel %vm306, %v288, 0
      %v323 = vsel %vm306, %v289, 0
      %v326 = vsel %vm306, %v290, 0
      %v329 = vsel %vm306, %v291, 0
      %v332 = vsel %vm306, %v292, 0
      %v335 = vsel %vm306, %v293, 0
      %v338 = vsel %vm306, %v294, 0
      %v341 = vsel %vm306, %v295, 0
      %v344 = vsel %vm306, %v296, 0
      %v347 = vsel %vm306, %v297, 0
      %v350 = vsel %vm306, %v298, 0
      %v353 = vsel %vm306, %v299, 0
      %355 = vmatpush.msra.mxu0 0.0
      %356 = vmatpush.msra.mxu0 0.0
      %357 = vmatpush.msra.mxu0 0.0
      %358 = vmatpush.msra.mxu0 0.0
      %359 = vmatpush.msra.mxu0 0.0
      %360 = vmatpush.msra.mxu0 0.0
      %361 = vmatpush.msra.mxu0 0.0
      %362 = vmatpush.msra.mxu0 0.0
      %363 = vmatpush.msra.mxu0 0.0
      %364 = vmatpush.msra.mxu0 0.0
      %365 = vmatpush.msra.mxu0 0.0
      %366 = vmatpush.msra.mxu0 0.0
      %367 = vmatpush.msra.mxu0 0.0
      %368 = vmatpush.msra.mxu0 0.0
      %369 = vmatpush.msra.mxu0 %v301
      %370 = vmatpush.msra.mxu0 %v300
      %371 = vmatmul.f32.gmra.mxu0 %v308
      %v372 = vpop.f32.mrf.mxu0
      %v373 = vadd.f32 %v304, %v372
      %374 = vmatmul.f32.gmra.mxu0 %v311
      %v375 = vpop.f32.mrf.mxu0
      %v376 = vadd.f32 %v304, %v375
      %377 = vmatmul.f32.gmra.mxu0 %v314
      %v378 = vpop.f32.mrf.mxu0
      %v379 = vadd.f32 %v304, %v378
      %380 = vmatmul.f32.gmra.mxu0 %v317
      %v381 = vpop.f32.mrf.mxu0
      %v382 = vadd.f32 %v304, %v381
      %383 = vmatmul.f32.gmra.mxu0 %v320
      %v384 = vpop.f32.mrf.mxu0
      %v385 = vadd.f32 %v304, %v384
      %386 = vmatmul.f32.gmra.mxu0 %v323
      %v387 = vpop.f32.mrf.mxu0
      %v388 = vadd.f32 %v304, %v387
      %389 = vmatmul.f32.gmra.mxu0 %v326
      %v390 = vpop.f32.mrf.mxu0
      %v391 = vadd.f32 %v304, %v390
      %392 = vmatmul.f32.gmra.mxu0 %v329
      %v393 = vpop.f32.mrf.mxu0
      %v394 = vadd.f32 %v304, %v393
      %395 = vmatmul.f32.gmra.mxu0 %v332
      %v396 = vpop.f32.mrf.mxu0
      %v397 = vadd.f32 %v304, %v396
      %398 = vmatmul.f32.gmra.mxu0 %v335
      %v399 = vpop.f32.mrf.mxu0
      %v400 = vadd.f32 %v304, %v399
      %401 = vmatmul.f32.gmra.mxu0 %v338
      %v402 = vpop.f32.mrf.mxu0
      %v403 = vadd.f32 %v304, %v402
      %404 = vmatmul.f32.gmra.mxu0 %v341
      %v405 = vpop.f32.mrf.mxu0
      %v406 = vadd.f32 %v304, %v405
      %407 = vmatmul.f32.gmra.mxu0 %v344
      %v408 = vpop.f32.mrf.mxu0
      %v409 = vadd.f32 %v304, %v408
      %410 = vmatmul.f32.gmra.mxu0 %v347
      %v411 = vpop.f32.mrf.mxu0
      %v412 = vadd.f32 %v304, %v411
      %413 = vmatmul.f32.gmra.mxu0 %v350
      %v414 = vpop.f32.mrf.mxu0
      %v415 = vadd.f32 %v304, %v414
      %416 = vmatmul.f32.gmra.mxu0 %v353
      %v417 = vpop.f32.mrf.mxu0
      %v418 = vadd.f32 %v304, %v417
      %419 = vdwg.mxu0
      %v420 = vmax.f32 %v373, 0.0
      %v421 = vmax.f32 %v376, 0.0
      %v422 = vmax.f32 %v379, 0.0
      %v423 = vmax.f32 %v382, 0.0
      %v424 = vmax.f32 %v385, 0.0
      %v425 = vmax.f32 %v388, 0.0
      %v426 = vmax.f32 %v391, 0.0
      %v427 = vmax.f32 %v394, 0.0
      %v428 = vmax.f32 %v397, 0.0
      %v429 = vmax.f32 %v400, 0.0
      %v430 = vmax.f32 %v403, 0.0
      %v431 = vmax.f32 %v406, 0.0
      %v432 = vmax.f32 %v409, 0.0
      %v433 = vmax.f32 %v412, 0.0
      %v434 = vmax.f32 %v415, 0.0
      %v435 = vmax.f32 %v418, 0.0
      %v436 = vld [vmem:[%s3] sm:$0xff]
      %v437 = vld [vmem:[%s3 + $0x8] sm:$0xf]
      %v438 = vld [vmem:[%s4] sm:$0x1]
      %v440 = vperm.slane %v438, 0
      %vm442 = vcmask 97280
      %v444 = vsel %vm442, %v420, 0
      %v447 = vsel %vm442, %v421, 0
      %v450 = vsel %vm442, %v422, 0
      %v453 = vsel %vm442, %v423, 0
      %v456 = vsel %vm442, %v424, 0
      %v459 = vsel %vm442, %v425, 0
      %v462 = vsel %vm442, %v426, 0
      %v465 = vsel %vm442, %v427, 0
      %v468 = vsel %vm442, %v428, 0
      %v471 = vsel %vm442, %v429, 0
      %v474 = vsel %vm442, %v430, 0
      %v477 = vsel %vm442, %v431, 0
      %v480 = vsel %vm442, %v432, 0
      %v483 = vsel %vm442, %v433, 0
      %v486 = vsel %vm442, %v434, 0
      %v489 = vsel %vm442, %v435, 0
      %vm491 = vcmask 1043456
      %v493 = vsel %vm491, %v437, 0
      %495 = vmatpush.msra.mxu0 0.0
      %496 = vmatpush.msra.mxu0 0.0
      %497 = vmatpush.msra.mxu0 0.0
      %498 = vmatpush.msra.mxu0 0.0
      %499 = vmatpush.msra.mxu0 0.0
      %500 = vmatpush.msra.mxu0 0.0
      %501 = vmatpush.msra.mxu0 0.0
      %502 = vmatpush.msra.mxu0 0.0
      %503 = vmatpush.msra.mxu0 0.0
      %504 = vmatpush.msra.mxu0 0.0
      %505 = vmatpush.msra.mxu0 0.0
      %506 = vmatpush.msra.mxu0 0.0
      %507 = vmatpush.msra.mxu0 0.0
      %508 = vmatpush.msra.mxu0 0.0
      %509 = vmatpush.msra.mxu0 %v493
      %510 = vmatpush.msra.mxu0 %v436
      %511 = vmatmul.f32.gmra.mxu0 %v444
      %v512 = vpop.f32.mrf.mxu0
      %v513 = vadd.f32 %v440, %v512
      %514 = vmatmul.f32.gmra.mxu0 %v447
      %v515 = vpop.f32.mrf.mxu0
      %v516 = vadd.f32 %v440, %v515
      %517 = vmatmul.f32.gmra.mxu0 %v450
      %v518 = vpop.f32.mrf.mxu0
      %v519 = vadd.f32 %v440, %v518
      %520 = vmatmul.f32.gmra.mxu0 %v453
      %v521 = vpop.f32.mrf.mxu0
      %v522 = vadd.f32 %v440, %v521
      %523 = vmatmul.f32.gmra.mxu0 %v456
      %v524 = vpop.f32.mrf.mxu0
      %v525 = vadd.f32 %v440, %v524
      %526 = vmatmul.f32.gmra.mxu0 %v459
      %v527 = vpop.f32.mrf.mxu0
      %v528 = vadd.f32 %v440, %v527
      %529 = vmatmul.f32.gmra.mxu0 %v462
      %v530 = vpop.f32.mrf.mxu0
      %v531 = vadd.f32 %v440, %v530
      %532 = vmatmul.f32.gmra.mxu0 %v465
      %v533 = vpop.f32.mrf.mxu0
      %v534 = vadd.f32 %v440, %v533
      %535 = vmatmul.f32.gmra.mxu0 %v468
      %v536 = vpop.f32.mrf.mxu0
      %v537 = vadd.f32 %v440, %v536
      %538 = vmatmul.f32.gmra.mxu0 %v471
      %v539 = vpop.f32.mrf.mxu0
      %v540 = vadd.f32 %v440, %v539
      %541 = vmatmul.f32.gmra.mxu0 %v474
      %v542 = vpop.f32.mrf.mxu0
      %v543 = vadd.f32 %v440, %v542
      %544 = vmatmul.f32.gmra.mxu0 %v477
      %v545 = vpop.f32.mrf.mxu0
      %v546 = vadd.f32 %v440, %v545
      %547 = vmatmul.f32.gmra.mxu0 %v480
      %v548 = vpop.f32.mrf.mxu0
      %v549 = vadd.f32 %v440, %v548
      %550 = vmatmul.f32.gmra.mxu0 %v483
      %v551 = vpop.f32.mrf.mxu0
      %v552 = vadd.f32 %v440, %v551
      %553 = vmatmul.f32.gmra.mxu0 %v486
      %v554 = vpop.f32.mrf.mxu0
      %v555 = vadd.f32 %v440, %v554
      %556 = vmatmul.f32.gmra.mxu0 %v489
      %v557 = vpop.f32.mrf.mxu0
      %v558 = vadd.f32 %v440, %v557
      %559 = vdwg.mxu0
      %v560 = vmax.f32 %v513, 0.0
      %v561 = vmax.f32 %v516, 0.0
      %v562 = vmax.f32 %v519, 0.0
      %v563 = vmax.f32 %v522, 0.0
      %v564 = vmax.f32 %v525, 0.0
      %v565 = vmax.f32 %v528, 0.0
      %v566 = vmax.f32 %v531, 0.0
      %v567 = vmax.f32 %v534, 0.0
      %v568 = vmax.f32 %v537, 0.0
      %v569 = vmax.f32 %v540, 0.0
      %v570 = vmax.f32 %v543, 0.0
      %v571 = vmax.f32 %v546, 0.0
      %v572 = vmax.f32 %v549, 0.0
      %v573 = vmax.f32 %v552, 0.0
      %v574 = vmax.f32 %v555, 0.0
      %v575 = vmax.f32 %v558, 0.0
      %v576 = vld [vmem:[%s5] sm:$0xff]
      %v577 = vld [vmem:[%s5 + $0x8] sm:$0xff]
      %v578 = vld [vmem:[%s5 + $0x10] sm:$0xff]
      %v579 = vld [vmem:[#allocation2] sm:$0x1]
      %v581 = vperm.slane %v579, 0
      %vm583 = vcmask 195584
      %v585 = vsel %vm583, %v560, 0
      %v588 = vsel %vm583, %v561, 0
      %v591 = vsel %vm583, %v562, 0
      %v594 = vsel %vm583, %v563, 0
      %v597 = vsel %vm583, %v564, 0
      %v600 = vsel %vm583, %v565, 0
      %v603 = vsel %vm583, %v566, 0
      %v606 = vsel %vm583, %v567, 0
      %v609 = vsel %vm583, %v568, 0
      %v612 = vsel %vm583, %v569, 0
      %v615 = vsel %vm583, %v570, 0
      %v618 = vsel %vm583, %v571, 0
      %v621 = vsel %vm583, %v572, 0
      %v624 = vsel %vm583, %v573, 0
      %v627 = vsel %vm583, %v574, 0
      %v630 = vsel %vm583, %v575, 0
      %632 = vmatpush.msra.mxu0 0.0
      %633 = vmatpush.msra.mxu0 0.0
      %634 = vmatpush.msra.mxu0 0.0
      %635 = vmatpush.msra.mxu0 0.0
      %636 = vmatpush.msra.mxu0 0.0
      %637 = vmatpush.msra.mxu0 0.0
      %638 = vmatpush.msra.mxu0 0.0
      %639 = vmatpush.msra.mxu0 0.0
      %640 = vmatpush.msra.mxu0 0.0
      %641 = vmatpush.msra.mxu0 0.0
      %642 = vmatpush.msra.mxu0 0.0
      %643 = vmatpush.msra.mxu0 0.0
      %644 = vmatpush.msra.mxu0 0.0
      %645 = vmatpush.msra.mxu0 %v578
      %646 = vmatpush.msra.mxu0 %v577
      %647 = vmatpush.msra.mxu0 %v576
      %648 = vmatmul.f32.gmra.mxu0 %v585
      %v649 = vpop.f32.mrf.mxu0
      %v650 = vadd.f32 %v581, %v649
      %651 = vmatmul.f32.gmra.mxu0 %v588
      %v652 = vpop.f32.mrf.mxu0
      %v653 = vadd.f32 %v581, %v652
      %654 = vmatmul.f32.gmra.mxu0 %v591
      %v655 = vpop.f32.mrf.mxu0
      %v656 = vadd.f32 %v581, %v655
      %657 = vmatmul.f32.gmra.mxu0 %v594
      %v658 = vpop.f32.mrf.mxu0
      %v659 = vadd.f32 %v581, %v658
      %660 = vmatmul.f32.gmra.mxu0 %v597
      %v661 = vpop.f32.mrf.mxu0
      %v662 = vadd.f32 %v581, %v661
      %663 = vmatmul.f32.gmra.mxu0 %v600
      %v664 = vpop.f32.mrf.mxu0
      %v665 = vadd.f32 %v581, %v664
      %666 = vmatmul.f32.gmra.mxu0 %v603
      %v667 = vpop.f32.mrf.mxu0
      %v668 = vadd.f32 %v581, %v667
      %669 = vmatmul.f32.gmra.mxu0 %v606
      %v670 = vpop.f32.mrf.mxu0
      %v671 = vadd.f32 %v581, %v670
      %672 = vmatmul.f32.gmra.mxu0 %v609
      %v673 = vpop.f32.mrf.mxu0
      %v674 = vadd.f32 %v581, %v673
      %675 = vmatmul.f32.gmra.mxu0 %v612
      %v676 = vpop.f32.mrf.mxu0
      %v677 = vadd.f32 %v581, %v676
      %678 = vmatmul.f32.gmra.mxu0 %v615
      %v679 = vpop.f32.mrf.mxu0
      %v680 = vadd.f32 %v581, %v679
      %681 = vmatmul.f32.gmra.mxu0 %v618
      %v682 = vpop.f32.mrf.mxu0
      %v683 = vadd.f32 %v581, %v682
      %684 = vmatmul.f32.gmra.mxu0 %v621
      %v685 = vpop.f32.mrf.mxu0
      %v686 = vadd.f32 %v581, %v685
      %687 = vmatmul.f32.gmra.mxu0 %v624
      %v688 = vpop.f32.mrf.mxu0
      %v689 = vadd.f32 %v581, %v688
      %690 = vmatmul.f32.gmra.mxu0 %v627
      %v691 = vpop.f32.mrf.mxu0
      %v692 = vadd.f32 %v581, %v691
      %693 = vmatmul.f32.gmra.mxu0 %v630
      %v694 = vpop.f32.mrf.mxu0
      %v695 = vadd.f32 %v581, %v694
      %696 = vdwg.mxu0
      %vm697 = vcmask 7168
      %698 = vst.msk [vmem:[%s282] sm:$0xff] %vm697, %v650
      %699 = vst.msk [vmem:[%s282 + $0x8] sm:$0xff] %vm697, %v653
      %700 = vst.msk [vmem:[%s282 + $0x10] sm:$0xff] %vm697, %v656
      %701 = vst.msk [vmem:[%s282 + $0x18] sm:$0xff] %vm697, %v659
      %702 = vst.msk [vmem:[%s282 + $0x20] sm:$0xff] %vm697, %v662
      %703 = vst.msk [vmem:[%s282 + $0x28] sm:$0xff] %vm697, %v665
      %704 = vst.msk [vmem:[%s282 + $0x30] sm:$0xff] %vm697, %v668
      %705 = vst.msk [vmem:[%s282 + $0x38] sm:$0xff] %vm697, %v671
      %706 = vst.msk [vmem:[%s282 + $0x40] sm:$0xff] %vm697, %v674
      %707 = vst.msk [vmem:[%s282 + $0x48] sm:$0xff] %vm697, %v677
      %708 = vst.msk [vmem:[%s282 + $0x50] sm:$0xff] %vm697, %v680
      %709 = vst.msk [vmem:[%s282 + $0x58] sm:$0xff] %vm697, %v683
      %710 = vst.msk [vmem:[%s282 + $0x60] sm:$0xff] %vm697, %v686
      %711 = vst.msk [vmem:[%s282 + $0x68] sm:$0xff] %vm697, %v689
      %712 = vst.msk [vmem:[%s282 + $0x70] sm:$0xff] %vm697, %v692
      %713 = vst.msk [vmem:[%s282 + $0x78] sm:$0xff] %vm697, %v695
      %s714 = smul.u32 16, %s20
      %p715 = scmp.lt.s32.totalorder %s714, 47
      %s716 = scalar_select %p715, %s714, 47
      %s717 = smul.addr %s716, 8
      %s718 = scalar_lea.vmem %s7, %s717
      // Predicated region
      $region49: #{tpu_custom_call.1} parent=47 // pred_check
        %p719 = pneg %p190
      $region50: #{tpu_custom_call.1} parent=47 // pred_check_branch
        %721 = sbr.rel (%p719) target = $region52
      $region51: #{tpu_custom_call.1} parent=47 // pred_region
        %s722 = smul.u32 16, %s20
      $region52: #{tpu_custom_call.1} parent=47 // pred_fallthru
        _
    $region48: #{tpu_custom_call.1} parent=5 // pred_fallthru
      _
    %p723 = scmp.le.s32.totalorder 2, %s15
    // Predicated region
    $region53: #{tpu_custom_call.1} parent=5 // pred_check
      %p724 = pneg %p723
    $region54: #{tpu_custom_call.1} parent=5 // pred_check_branch
      %726 = sbr.rel (%p724) target = $region56
    $region55: #{tpu_custom_call.1} parent=5 // pred_region
      %s727 = ssub.s32 %s15, 2
      // Predicated region
      $region57: #{tpu_custom_call.1} parent=55 // pred_check
        %p728 = pneg %p196
      $region58: #{tpu_custom_call.1} parent=55 // pred_check_branch
        %730 = sbr.rel (%p728) target = $region60
      $region59: #{tpu_custom_call.1} parent=55 // pred_region
        %s731 = smul.u32 16, %s21
        %p732 = scmp.lt.s32.totalorder %s731, 47
        %s733 = scalar_select %p732, %s731, 47
        %s734 = smul.addr %s733, 8
        %s735 = scalar_lea.vmem %s7, %s734
      $region60: #{tpu_custom_call.1} parent=55 // pred_fallthru
        _
    $region56: #{tpu_custom_call.1} parent=5 // pred_fallthru
      _
  $region6: #{tpu_custom_call.1} parent=0 // loop_footer
    %s19 = sadd.s32 1, %s15
  $region7: #{tpu_custom_call.1} parent=0 // loop_footer_branch
    %14 = sbr.rel target = $region3
  $region8: #{tpu_custom_call.1} parent=0 // loop_exit
    _

</llo_original>
